<compile_context>
chip_gen: v7x
topology: tpu7x:2x2x1
jax: 0.10.0
libtpu: 0.0.40
codegen_flags: <defaults>
</compile_context>

<pallas_src>
import functools

import jax
import jax.numpy as jnp
from jax.experimental import pallas as pl
from jax.experimental.pallas import tpu as pltpu


def _fcn_kernel(x_ref, w1_ref, b1_ref, w2_ref, b2_ref, out_ref):
    x = x_ref[...]                      # (tbp, pack*in): `pack` batch rows per sublane row
    w2 = w2_ref[...]                    # (pack*hidden, pack) block-diagonal w2 column

    # Layer 1: canonical MXU matmul against the block-diagonal packed weight.
    h = jnp.dot(x, w1_ref[...], preferred_element_type=jnp.float32)   # (tbp, pack*hidden)
    h = jnp.maximum(h + b1_ref[...], 0.0)        # bias (1, pack*hidden) broadcast; ReLU on VPU

    # Dropout: inference-mode identity.
    # TODO(synk): training-mode dropout (Bernoulli mask / (1 - p)) not implemented.

    # Layer 2 (hidden -> 1 per packed slot) == segmented reduce over each `hidden`-lane
    # segment, done as a single MXU pass (the MXU slot has slack; avoids a sparse XLU
    # lane reduction).  logits[p, j] = logit of batch row pack*p + j.
    logits = jnp.dot(h.astype(w2.dtype), w2,
                     preferred_element_type=jnp.float32) + b2_ref[...]   # (tbp, pack)
    out_ref[...] = jax.nn.sigmoid(logits)        # EUP; tiny (tbp, pack) store


@functools.partial(jax.jit, static_argnames=("block_b",))
def fcn_binary_classifier(x, w1, b1, w2, b2, *, block_b=32768):
    """Forward pass of FcnBinaryClassifier (inference).

    Args:
      x:  [B, input_size] f32 or bf16 (streamed in its native dtype, never copied)
      w1: [hidden, input_size]   (torch nn.Linear(input, hidden).weight layout)
      b1: [hidden]
      w2: [1, hidden]            (torch nn.Linear(hidden, 1).weight layout)
      b2: [1]
      block_b: batch rows per grid step (rounded to packing/sublane granularity).
    Returns:
      probs: [B] f32
    """
    B, in_size = x.shape
    hidden = w1.shape[0]
    cdtype = x.dtype                    # matmul input dtype == streamed dtype (no astype copy)

    # Lane-packing factor: `pack` consecutive batch rows share one 128-lane sublane row.
    # Falls back to pack=1 (unpacked, still a canonical matmul) when the free reshape is
    # impossible -- never pads or copies x (padding x would double HBM traffic).
    if in_size <= 128 and 128 % in_size == 0 and B % (128 // in_size) == 0:
        pack = 128 // in_size
    else:
        pack = 1                        # TODO(synk): odd in_size / batch -> unpacked slow path

    BP = B // pack
    xp = x.reshape(BP, pack * in_size)  # free: row-major contiguous, no data movement

    # Block-diagonal packed weights (tiny; VMEM-resident across all grid steps).
    eye = jnp.eye(pack, dtype=cdtype)
    w1_big = jnp.kron(eye, w1.T.astype(cdtype))                    # (pack*in, pack*hidden)
    w2_big = jnp.kron(eye, w2.reshape(hidden, 1).astype(cdtype))   # (pack*hidden, pack)
    b1t = jnp.tile(b1.astype(jnp.float32), pack).reshape(1, pack * hidden)
    b2c = b2.reshape(1, 1).astype(jnp.float32)

    # Packed-row tile.  Default block_b=32768 rows -> 8192 packed rows:
    #   x double-buffered: 2 * 8192*128*4 B = 8 MiB (f32) / 4 MiB (bf16), plus f32
    #   h/logits temps and lane-padded out buffers ~= 25-35 MiB total -> needs an
    #   explicit vmem_limit_bytes on v5e (16 MiB scoped default) and keeps ~25% headroom
    #   on v7x's 64 MiB physical VMEM.  On v6e/v7x block_b can be raised to 65536+
    #   (especially with bf16 x) to amortize the ~0.35 us per-grid-step overhead further.
    tbp = max(32, (block_b // pack) // 32 * 32)
    tbp = min(tbp, max(32, (BP // 32) * 32))   # don't request blocks far larger than the data
    grid = (pl.cdiv(BP, tbp),)                 # ragged last block: OOB reads unspecified,
                                               # OOB writes dropped; rows are independent.

    out = pl.pallas_call(
        _fcn_kernel,
        out_shape=jax.ShapeDtypeStruct((BP, pack), jnp.float32),
        grid_spec=pltpu.PrefetchScalarGridSpec(
            num_scalar_prefetch=0,
            grid=grid,
            in_specs=[
                pl.BlockSpec((tbp, pack * in_size), lambda i: (i, 0)),            # x streamed
                pl.BlockSpec((pack * in_size, pack * hidden), lambda i: (0, 0)),  # W1 resident
                pl.BlockSpec((1, pack * hidden), lambda i: (0, 0)),               # b1
                pl.BlockSpec((pack * hidden, pack), lambda i: (0, 0)),            # W2 column
                pl.BlockSpec((1, 1), lambda i: (0, 0)),                           # b2
            ],
            out_specs=pl.BlockSpec((tbp, pack), lambda i: (i, 0)),
        ),
        compiler_params=pltpu.CompilerParams(
            # Batch tiles are independent.  On v7x, if a trace shows only one TensorCore
            # busy, switch this axis to pltpu.CORE_PARALLEL (no effect on v5e/v6e).
            dimension_semantics=("parallel",),
            vmem_limit_bytes=48 * 1024 * 1024,
        ),
        cost_estimate=pl.CostEstimate(
            flops=2 * B * in_size * hidden + 2 * B * hidden + 4 * B,
            transcendentals=B,
            bytes_accessed=(xp.size * xp.dtype.itemsize + B * 4
                            + (w1_big.size + w2_big.size) * w1_big.dtype.itemsize
                            + (pack * hidden + 1) * 4),
        ),
    )(xp, w1_big, b1t, w2_big, b2c)
    return out.reshape(B)


def _ref_forward(x, w1, b1, w2, b2):
    h = jnp.maximum(x @ w1.T + b1, 0.0)
    return jax.nn.sigmoid(h @ w2.T + b2)[:, 0]


if __name__ == "__main__":
    # B=200 -> 50 packed rows, tile=32 packed rows, grid=(2,), last block ragged:
    # exercises the no-padding cdiv path.  input/hidden = 32 -> pack = 4.
    batch, input_size, hidden_size = 200, 32, 32

    key = jax.random.PRNGKey(0)
    kx, kw1, kb1, kw2, kb2 = jax.random.split(key, 5)

    x = jax.random.normal(kx, (batch, input_size), dtype=jnp.float32)

    # Deterministic parameters in torch nn.Linear layouts.
    bound1 = 1.0 / jnp.sqrt(input_size)
    w1 = jax.random.uniform(kw1, (hidden_size, input_size), jnp.float32, -bound1, bound1)
    b1 = jax.random.uniform(kb1, (hidden_size,), jnp.float32, -bound1, bound1)
    bound2 = 1.0 / jnp.sqrt(hidden_size)
    w2 = jax.random.uniform(kw2, (1, hidden_size), jnp.float32, -bound2, bound2)
    b2 = jax.random.uniform(kb2, (1,), jnp.float32, -bound2, bound2)

    ref = _ref_forward(x, w1, b1, w2, b2)

    # f32 path (matches the PyTorch module's float32 semantics).
    probs = jax.block_until_ready(fcn_binary_classifier(x, w1, b1, w2, b2))
    assert probs.shape == (batch,)
    assert jnp.allclose(probs, ref, atol=1e-5, rtol=1e-5), float(jnp.max(jnp.abs(probs - ref)))

    # bf16 streaming path: halves streamed HBM bytes; kernel is dtype-polymorphic in x.
    probs_bf16 = jax.block_until_ready(
        fcn_binary_classifier(x.astype(jnp.bfloat16), w1, b1, w2, b2))
    assert probs_bf16.shape == (batch,)
    assert jnp.allclose(probs_bf16, ref, atol=2e-2, rtol=0.0), float(
        jnp.max(jnp.abs(probs_bf16 - ref)))

    print("KERNEL_OK")
</pallas_src>

<mosaic_0001>
module attributes {stable_mosaic.version = 11 : i64} {
  func.func @_fcn_kernel(%arg0: i32, %arg1: memref<32x128xf32, #tpu.memory_space<vmem>>, %arg2: memref<128x128xf32, #tpu.memory_space<vmem>>, %arg3: memref<1x128xf32, #tpu.memory_space<vmem>>, %arg4: memref<128x4xf32, #tpu.memory_space<vmem>>, %arg5: memref<1x1xf32, #tpu.memory_space<vmem>>, %arg6: memref<32x4xf32, #tpu.memory_space<vmem>>) attributes {dimension_semantics = [#tpu.dimension_semantics<parallel>], iteration_bounds = array<i64: 2>, scalar_prefetch = 0 : i64, scratch_operands = 0 : i64, tpu.core_type = #tpu.core_type<tc>, window_params = [{transform_indices = @transform_0, window_bounds = array<i64: 32, 128>}, {pipeline_mode = #tpu.pipeline_mode<synchronous>, transform_indices = @transform_1, window_bounds = array<i64: 128, 128>}, {pipeline_mode = #tpu.pipeline_mode<synchronous>, transform_indices = @transform_2, window_bounds = array<i64: 1, 128>}, {pipeline_mode = #tpu.pipeline_mode<synchronous>, transform_indices = @transform_3, window_bounds = array<i64: 128, 4>}, {pipeline_mode = #tpu.pipeline_mode<synchronous>, transform_indices = @transform_4, window_bounds = array<i64: 1, 1>}, {transform_indices = @transform_5, window_bounds = array<i64: 32, 4>}]} {
    %c0 = arith.constant 0 : index
    %c0_0 = arith.constant 0 : index
    %0 = vector.load %arg1[%c0, %c0_0] : memref<32x128xf32, #tpu.memory_space<vmem>>, vector<32x128xf32>
    %c0_1 = arith.constant 0 : index
    %c0_2 = arith.constant 0 : index
    %1 = vector.load %arg4[%c0_1, %c0_2] : memref<128x4xf32, #tpu.memory_space<vmem>>, vector<128x4xf32>
    %c0_3 = arith.constant 0 : index
    %c0_4 = arith.constant 0 : index
    %2 = vector.load %arg2[%c0_3, %c0_4] : memref<128x128xf32, #tpu.memory_space<vmem>>, vector<128x128xf32>
    %cst = arith.constant dense<0.000000e+00> : vector<32x128xf32>
    %3 = tpu.matmul %0, %2, %cst {dimension_numbers = #tpu.dot_dimension_numbers<[1], [0], [0], [1], [0, 0, 1, 1], [], []>} : vector<32x128xf32>, vector<128x128xf32>, vector<32x128xf32> -> vector<32x128xf32>
    %c0_5 = arith.constant 0 : index
    %c0_6 = arith.constant 0 : index
    %4 = vector.load %arg3[%c0_5, %c0_6] : memref<1x128xf32, #tpu.memory_space<vmem>>, vector<1x128xf32>
    %5 = vector.broadcast %4 : vector<1x128xf32> to vector<32x128xf32>
    %6 = arith.addf %3, %5 : vector<32x128xf32>
    %cst_7 = arith.constant 0.000000e+00 : f32
    %7 = vector.broadcast %cst_7 : f32 to vector<32x128xf32>
    %8 = arith.maximumf %6, %7 : vector<32x128xf32>
    %cst_8 = arith.constant dense<0.000000e+00> : vector<32x4xf32>
    %9 = tpu.matmul %8, %1, %cst_8 {dimension_numbers = #tpu.dot_dimension_numbers<[1], [0], [0], [1], [0, 0, 1, 1], [], []>} : vector<32x128xf32>, vector<128x4xf32>, vector<32x4xf32> -> vector<32x4xf32>
    %c0_9 = arith.constant 0 : index
    %c0_10 = arith.constant 0 : index
    %10 = vector.load %arg5[%c0_9, %c0_10] : memref<1x1xf32, #tpu.memory_space<vmem>>, vector<1x1xf32>
    %11 = vector.broadcast %10 : vector<1x1xf32> to vector<32x4xf32>
    %12 = arith.addf %9, %11 : vector<32x4xf32>
    %13 = arith.negf %12 : vector<32x4xf32>
    %14 = math.exp %13 : vector<32x4xf32>
    %cst_11 = arith.constant 1.000000e+00 : f32
    %15 = vector.broadcast %cst_11 : f32 to vector<32x4xf32>
    %16 = arith.addf %15, %14 : vector<32x4xf32>
    %17 = arith.divf %15, %16 : vector<32x4xf32>
    %c0_12 = arith.constant 0 : index
    %c0_13 = arith.constant 0 : index
    %18 = vector.load %arg6[%c0_12, %c0_13] : memref<32x4xf32, #tpu.memory_space<vmem>>, vector<32x4xf32>
    tpu.vector_store %arg6[%c0_12, %c0_13], %17 {strides = array<i32>} : memref<32x4xf32, #tpu.memory_space<vmem>>, vector<32x4xf32>,
    return
  }
  func.func @transform_0(%arg0: i32) -> (i32, i32) {
    %c0_i32 = arith.constant 0 : i32
    %c0_i32_0 = arith.constant 0 : i32
    return %arg0, %c0_i32 : i32, i32
  }
  func.func @transform_1(%arg0: i32) -> (i32, i32) {
    %c0_i32 = arith.constant 0 : i32
    %c0_i32_0 = arith.constant 0 : i32
    %c0_i32_1 = arith.constant 0 : i32
    return %c0_i32, %c0_i32_0 : i32, i32
  }
  func.func @transform_2(%arg0: i32) -> (i32, i32) {
    %c0_i32 = arith.constant 0 : i32
    %c0_i32_0 = arith.constant 0 : i32
    %c0_i32_1 = arith.constant 0 : i32
    return %c0_i32, %c0_i32_0 : i32, i32
  }
  func.func @transform_3(%arg0: i32) -> (i32, i32) {
    %c0_i32 = arith.constant 0 : i32
    %c0_i32_0 = arith.constant 0 : i32
    %c0_i32_1 = arith.constant 0 : i32
    return %c0_i32, %c0_i32_0 : i32, i32
  }
  func.func @transform_4(%arg0: i32) -> (i32, i32) {
    %c0_i32 = arith.constant 0 : i32
    %c0_i32_0 = arith.constant 0 : i32
    %c0_i32_1 = arith.constant 0 : i32
    return %c0_i32, %c0_i32_0 : i32, i32
  }
  func.func @transform_5(%arg0: i32) -> (i32, i32) {
    %c0_i32 = arith.constant 0 : i32
    %c0_i32_0 = arith.constant 0 : i32
    return %arg0, %c0_i32 : i32, i32
  }
}

</mosaic_0001>

<llo_original>
// kernel: tile.9
$region0: #{tile.9}
  %s0 = inlined_call_operand.vmem [shape: f32[4,32], index: 0, kind: input, shape index: {}]
  %s1 = inlined_call_operand.vmem [shape: f32[1,128], index: 1, kind: output, shape index: {}]
  $region1: #{tile.9} parent=0
    #allocation0 [shape = 'u8[4096]{0}', space=vmem, size = 0x1000, scoped, tag = 'scoped mem for output reshape']
    #allocation1 [shape = 'u8[4096]{0}', space=vmem, size = 0x1000, scoped, tag = 'scoped mem for input reshape']
    %s3 = sshllo.u32 0, 4
    %v4 = vld [vmem:[%s0] sm:%s3]
    %5 = vst [vmem:[#allocation1] sm:%s3] %v4
    %v6 = vld [vmem:[#allocation1] sm:$0x1]
    %vm7 = vcmask 261120
    %8 = vst.msk [vmem:[#allocation0] sm:$0x1] %vm7, %v6
    %s9 = scalar_lea.vmem [#allocation1], 3
    %v10 = vld [vmem:[%s9] sm:$0x1]
    %11 = vrot.lane.b32.xlu0 %v10, 96
    %v12 = vpop.permute.xlu0 %11
    %vm13 = vcmask 1048320
    %14 = vst.msk [vmem:[#allocation0] sm:$0x1] %vm13, %v12
    %s15 = scalar_lea.vmem [#allocation1], 2
    %v16 = vld [vmem:[%s15] sm:$0x1]
    %17 = vrot.lane.b32.xlu0 %v16, 64
    %v18 = vpop.permute.xlu0 %17
    %vm19 = vcmask 785920
    %20 = vst.msk [vmem:[#allocation0] sm:$0x1] %vm19, %v18
    %s21 = scalar_lea.vmem [#allocation1], 1
    %v22 = vld [vmem:[%s21] sm:$0x1]
    %23 = vrot.lane.b32.xlu0 %v22, 32
    %v24 = vpop.permute.xlu0 %23
    %vm25 = vcmask 523520
    %26 = vst.msk [vmem:[#allocation0] sm:$0x1] %vm25, %v24
    %s28 = sshllo.u32 0, 1
    %v30 = vld [vmem:[#allocation0] sm:%s28]
    %s31 = sshllo.u32 0, 1
    %32 = vst [vmem:[%s1] sm:%s31] %v30

// kernel: fcn_binary_classifier.1
$region0: #{fcn_binary_classifier.1}
  #allocation0 [shape = 'u32[]', space=smem, size = 0x4, offset = 0x4, fixed_abs, tag = 'smem constant byte address 0x4 - core index']
  #allocation1 [shape = 'u32[144,128]{1,0:T(1,128)}', space=vmem, size = 0x12000, scoped, tag = 'internal scratch']
  #allocation2 [shape = 'f32[1,1]{1,0:T(1,128)S(1)}', space=vmem, size = 0x200, scoped, tag = 'scoped memory for fcn_binary_classifier.1']
  %s0 = inlined_call_operand.vmem [shape: f32[50,128], index: 0, kind: input, shape index: {}]
  %s1 = inlined_call_operand.vmem [shape: f32[128,128], index: 1, kind: input, shape index: {}]
  %s2 = inlined_call_operand.vmem [shape: f32[1,128], index: 2, kind: input, shape index: {}]
  %s3 = inlined_call_operand.vmem [shape: f32[128,4], index: 3, kind: input, shape index: {}]
  %s4 = inlined_call_operand.<no memory space> [shape: f32[1,1], index: 4, kind: input, shape index: {}]
  %s5 = inlined_call_operand.vmem [shape: f32[50,4], index: 5, kind: output, shape index: {}]
  %s6 = sld [smem:[#allocation0]]
  $region101: #{fcn_binary_classifier.1} parent=0
    _
  %s8 = ssub.s32 1, %s6
  %s9 = scalar_select 0, %s8, %s6
  %v10 = vstv %s4
  %11 = vst [vmem:[#allocation2] sm:$0x1] %v10
  $region1: #{fcn_binary_classifier.1} parent=0
    #allocation3 [shape = 'u8[32768]{0}', space=vmem, size = 0x8000, scoped, tag = 'output window, operand 0']
    loop: start=0, step=1, limit=4
    $region2: #{fcn_binary_classifier.1} parent=1 // loop_pre_header
      _
    $region3: #{fcn_binary_classifier.1} parent=1 // loop_header
      %s13 = sphi 0, %s17
      %p14 = scmp.ge.s32.totalorder %s13, 4
      %s23 = sphi 0, %s25
      %s26 = sphi 0, %s23
      %s27 = sphi 0, %s26
      %s43 = sphi 0, %s27
      %s47 = sphi 0, %s47
      %s49 = sphi 0, %s47
      %s50 = sphi 0, %s49
      %s64 = sphi 0, %s50
      %s68 = sphi 0, %s68
      %s70 = sphi 0, %s68
      %s71 = sphi 0, %s70
      %s85 = sphi 0, %s71
      %s89 = sphi 0, %s89
      %s91 = sphi 0, %s89
      %s92 = sphi 0, %s91
      %s106 = sphi 0, %s92
      %s110 = sphi 0, %s110
      %s112 = sphi 0, %s110
      %s113 = sphi 0, %s112
      %s127 = sphi 0, %s113
      %s133 = sphi 0, %s135
      %s136 = sphi 0, %s133
      %s137 = sphi 0, %s136
      %s153 = sphi 0, %s137
    $region4: #{fcn_binary_classifier.1} parent=1 // loop_header_branch
      %16 = sbr.rel (%p14) target = $region8
    $region5: #{fcn_binary_classifier.1} parent=1 // loop_body
      %s18 = ssub.s32 %s13, 1
      %s19 = ssub.s32 %s13, 2
      %s20 = sadd.s32 %s13, 1
      %s21 = ssub.s32 %s13, %s20
      %p22 = scmp.eq.s32.totalorder %s21, 0
      %s24 = sadd.s32 %s23, 1
      %s25 = scalar_select %p22, %s23, %s24
      %p28 = pneg %p22
      %p29 = scmp.eq.s32.totalorder %s13, 1
      %p30 = por %p28, %p29
      %p31 = scmp.ne.s32.totalorder %s23, %s26
      %p32 = scmp.eq.s32.totalorder %s13, 0
      %p33 = por %p31, %p32
      %p34 = scmp.ne.s32.totalorder %s23, %s26
      %p35 = scmp.eq.s32.totalorder %s18, 1
      %p36 = por %p34, %p35
      %p37 = scmp.ne.s32.totalorder %s26, %s27
      %p38 = scmp.eq.s32.totalorder %s18, 0
      %p39 = por %p37, %p38
      %p40 = scmp.ne.s32.totalorder %s26, %s27
      %p41 = scmp.eq.s32.totalorder %s19, 1
      %p42 = por %p40, %p41
      %p44 = scmp.ne.s32.totalorder %s27, %s43
      %p45 = scmp.eq.s32.totalorder %s19, 0
      %p46 = por %p44, %p45
      %s48 = sadd.s32 %s47, 1
      %p51 = scmp.eq.s32.totalorder %s13, 1
      %p52 = scmp.ne.s32.totalorder %s47, %s49
      %p53 = scmp.eq.s32.totalorder %s13, 0
      %p54 = por %p52, %p53
      %p55 = scmp.ne.s32.totalorder %s47, %s49
      %p56 = scmp.eq.s32.totalorder %s18, 1
      %p57 = por %p55, %p56
      %p58 = scmp.ne.s32.totalorder %s49, %s50
      %p59 = scmp.eq.s32.totalorder %s18, 0
      %p60 = por %p58, %p59
      %p61 = scmp.ne.s32.totalorder %s49, %s50
      %p62 = scmp.eq.s32.totalorder %s19, 1
      %p63 = por %p61, %p62
      %p65 = scmp.ne.s32.totalorder %s50, %s64
      %p66 = scmp.eq.s32.totalorder %s19, 0
      %p67 = por %p65, %p66
      %s69 = sadd.s32 %s68, 1
      %p72 = scmp.eq.s32.totalorder %s13, 1
      %p73 = scmp.ne.s32.totalorder %s68, %s70
      %p74 = scmp.eq.s32.totalorder %s13, 0
      %p75 = por %p73, %p74
      %p76 = scmp.ne.s32.totalorder %s68, %s70
      %p77 = scmp.eq.s32.totalorder %s18, 1
      %p78 = por %p76, %p77
      %p79 = scmp.ne.s32.totalorder %s70, %s71
      %p80 = scmp.eq.s32.totalorder %s18, 0
      %p81 = por %p79, %p80
      %p82 = scmp.ne.s32.totalorder %s70, %s71
      %p83 = scmp.eq.s32.totalorder %s19, 1
      %p84 = por %p82, %p83
      %p86 = scmp.ne.s32.totalorder %s71, %s85
      %p87 = scmp.eq.s32.totalorder %s19, 0
      %p88 = por %p86, %p87
      %s90 = sadd.s32 %s89, 1
      %p93 = scmp.eq.s32.totalorder %s13, 1
      %p94 = scmp.ne.s32.totalorder %s89, %s91
      %p95 = scmp.eq.s32.totalorder %s13, 0
      %p96 = por %p94, %p95
      %p97 = scmp.ne.s32.totalorder %s89, %s91
      %p98 = scmp.eq.s32.totalorder %s18, 1
      %p99 = por %p97, %p98
      %p100 = scmp.ne.s32.totalorder %s91, %s92
      %p101 = scmp.eq.s32.totalorder %s18, 0
      %p102 = por %p100, %p101
      %p103 = scmp.ne.s32.totalorder %s91, %s92
      %p104 = scmp.eq.s32.totalorder %s19, 1
      %p105 = por %p103, %p104
      %p107 = scmp.ne.s32.totalorder %s92, %s106
      %p108 = scmp.eq.s32.totalorder %s19, 0
      %p109 = por %p107, %p108
      %s111 = sadd.s32 %s110, 1
      %p114 = scmp.eq.s32.totalorder %s13, 1
      %p115 = scmp.ne.s32.totalorder %s110, %s112
      %p116 = scmp.eq.s32.totalorder %s13, 0
      %p117 = por %p115, %p116
      %p118 = scmp.ne.s32.totalorder %s110, %s112
      %p119 = scmp.eq.s32.totalorder %s18, 1
      %p120 = por %p118, %p119
      %p121 = scmp.ne.s32.totalorder %s112, %s113
      %p122 = scmp.eq.s32.totalorder %s18, 0
      %p123 = por %p121, %p122
      %p124 = scmp.ne.s32.totalorder %s112, %s113
      %p125 = scmp.eq.s32.totalorder %s19, 1
      %p126 = por %p124, %p125
      %p128 = scmp.ne.s32.totalorder %s113, %s127
      %p129 = scmp.eq.s32.totalorder %s19, 0
      %p130 = por %p128, %p129
      %s131 = ssub.s32 %s13, %s20
      %p132 = scmp.eq.s32.totalorder %s131, 0
      %s134 = sadd.s32 %s133, 1
      %s135 = scalar_select %p132, %s133, %s134
      %p138 = pneg %p132
      %p139 = scmp.eq.s32.totalorder %s13, 1
      %p140 = por %p138, %p139
      %p141 = scmp.ne.s32.totalorder %s133, %s136
      %p142 = scmp.eq.s32.totalorder %s13, 0
      %p143 = por %p141, %p142
      %p144 = scmp.ne.s32.totalorder %s133, %s136
      %p145 = scmp.eq.s32.totalorder %s18, 1
      %p146 = por %p144, %p145
      %p147 = scmp.ne.s32.totalorder %s136, %s137
      %p148 = scmp.eq.s32.totalorder %s18, 0
      %p149 = por %p147, %p148
      %p150 = scmp.ne.s32.totalorder %s136, %s137
      %p151 = scmp.eq.s32.totalorder %s19, 1
      %p152 = por %p150, %p151
      %p154 = scmp.ne.s32.totalorder %s137, %s153
      %p155 = scmp.eq.s32.totalorder %s19, 0
      %p156 = por %p154, %p155
      %p157 = scmp.le.s32.totalorder 1, %s13
      %p158 = scmp.lt.s32.totalorder %s13, 3
      %p159 = pnand %p157, %p158
      %p160 = pneg %p159
      // Predicated region
      $region9: #{fcn_binary_classifier.1} parent=5 // pred_check
        _
      $region10: #{fcn_binary_classifier.1} parent=5 // pred_check_branch
        %162 = sbr.rel (%p159) target = $region12
      $region11: #{fcn_binary_classifier.1} parent=5 // pred_region
        %s163 = ssub.s32 %s13, 1
        // Predicated region
        $region13: #{fcn_binary_classifier.1} parent=11 // pred_check
          %p164 = pneg %p60
        $region14: #{fcn_binary_classifier.1} parent=11 // pred_check_branch
          %166 = sbr.rel (%p164) target = $region16
        $region15: #{fcn_binary_classifier.1} parent=11 // pred_region
          _
        $region16: #{fcn_binary_classifier.1} parent=11 // pred_fallthru
          _
        // Predicated region
        $region17: #{fcn_binary_classifier.1} parent=11 // pred_check
          %p167 = pneg %p81
        $region18: #{fcn_binary_classifier.1} parent=11 // pred_check_branch
          %169 = sbr.rel (%p167) target = $region20
        $region19: #{fcn_binary_classifier.1} parent=11 // pred_region
          _
        $region20: #{fcn_binary_classifier.1} parent=11 // pred_fallthru
          _
        // Predicated region
        $region21: #{fcn_binary_classifier.1} parent=11 // pred_check
          %p170 = pneg %p102
        $region22: #{fcn_binary_classifier.1} parent=11 // pred_check_branch
          %172 = sbr.rel (%p170) target = $region24
        $region23: #{fcn_binary_classifier.1} parent=11 // pred_region
          _
        $region24: #{fcn_binary_classifier.1} parent=11 // pred_fallthru
          _
        // Predicated region
        $region25: #{fcn_binary_classifier.1} parent=11 // pred_check
          %p173 = pneg %p123
        $region26: #{fcn_binary_classifier.1} parent=11 // pred_check_branch
          %175 = sbr.rel (%p173) target = $region28
        $region27: #{fcn_binary_classifier.1} parent=11 // pred_region
          _
        $region28: #{fcn_binary_classifier.1} parent=11 // pred_fallthru
          _
      $region12: #{fcn_binary_classifier.1} parent=5 // pred_fallthru
        _
      %p176 = scmp.lt.s32.totalorder %s13, 2
      // Predicated region
      $region29: #{fcn_binary_classifier.1} parent=5 // pred_check
        %p177 = pneg %p176
      $region30: #{fcn_binary_classifier.1} parent=5 // pred_check_branch
        %179 = sbr.rel (%p177) target = $region32
      $region31: #{fcn_binary_classifier.1} parent=5 // pred_region
        // Predicated region
        $region33: #{fcn_binary_classifier.1} parent=31 // pred_check
          %p180 = pneg %p33
        $region34: #{fcn_binary_classifier.1} parent=31 // pred_check_branch
          %182 = sbr.rel (%p180) target = $region36
        $region35: #{fcn_binary_classifier.1} parent=31 // pred_region
          %s183 = smul.u32 4, %s13
          %s184 = ssub.s32 7, %s183
          %p185 = scmp.lt.s32.totalorder %s184, 4
          %s186 = scalar_select %p185, %s184, 4
          %s187 = smul.u32 128, %s186
          %p188 = scmp.lt.s32.totalorder %s183, 6
          %s189 = scalar_select %p188, %s183, 6
          %s190 = smul.addr %s189, 8
          %s191 = scalar_lea.vmem %s0, %s190
          %s192 = smul.u32 4, %s13
          %s193 = ssub.s32 7, %s192
          %p194 = scmp.lt.s32.totalorder %s193, 4
          %s195 = scalar_select %p194, %s193, 4
          %s196 = smul.u32 128, %s195
        $region36: #{fcn_binary_classifier.1} parent=31 // pred_fallthru
          _
      $region32: #{fcn_binary_classifier.1} parent=5 // pred_fallthru
        _
      %p197 = scmp.le.s32.totalorder 1, %s13
      %p198 = scmp.lt.s32.totalorder %s13, 3
      %p199 = pnand %p197, %p198
      %p200 = pneg %p199
      // Predicated region
      $region37: #{fcn_binary_classifier.1} parent=5 // pred_check
        _
      $region38: #{fcn_binary_classifier.1} parent=5 // pred_check_branch
        %202 = sbr.rel (%p199) target = $region40
      $region39: #{fcn_binary_classifier.1} parent=5 // pred_region
        %s203 = ssub.s32 %s13, 1
        %s204 = smul.u32 4, %s18
        %s205 = ssub.s32 7, %s204
        %p206 = scmp.lt.s32.totalorder %s205, 4
        %s207 = scalar_select %p206, %s205, 4
        %s208 = smul.u32 128, %s207
        %p209 = scmp.lt.s32.totalorder %s204, 6
        %s210 = scalar_select %p209, %s204, 6
        %s211 = smul.addr %s210, 8
        %s212 = scalar_lea.vmem %s0, %s211
        %p213 = pneg %p39
        %p214 = pneg %p36
        %p215 = pneg %p60
        %p216 = pneg %p57
        %p217 = pneg %p81
        %p218 = pneg %p78
        %p219 = pneg %p102
        %p220 = pneg %p99
        %p221 = pneg %p123
        %p222 = pneg %p120
        %p223 = pneg %p149
        %p224 = pneg %p146
        %s225 = sand.u32 %s136, 1
        %s226 = sand.u32 %s136, 1
        %s227 = smul.addr %s226, 32
        %s228 = scalar_lea.vmem [#allocation3], %s227
        %s229 = smul.u32 4, %s18
        %s230 = ssub.s32 7, %s229
        %p231 = scmp.lt.s32.totalorder %s230, 4
        %s232 = scalar_select %p231, %s230, 4
        %s233 = smul.u32 128, %s232
        %p234 = scmp.lt.s32.totalorder %s229, 6
        %s235 = scalar_select %p234, %s229, 6
        %s236 = smul.addr %s235, 8
        %s237 = scalar_lea.vmem %s0, %s236
        %s238 = smul.u32 4, %s18
        %s239 = ssub.s32 7, %s238
        %p240 = scmp.lt.s32.totalorder %s239, 4
        %s241 = scalar_select %p240, %s239, 4
        %s242 = smul.u32 128, %s241
        %s243 = smul.u32 4, %s18
        %s244 = ssub.s32 7, %s243
        %p245 = scmp.lt.s32.totalorder %s244, 4
        %s246 = scalar_select %p245, %s244, 4
        %s247 = smul.u32 128, %s246
        %v248 = vld [vmem:[%s237] sm:$0xff]
        %v249 = vld [vmem:[%s237 + $0x8] sm:$0xff]
        %v250 = vld [vmem:[%s237 + $0x10] sm:$0xff]
        %v251 = vld [vmem:[%s237 + $0x18] sm:$0xff]
        %v252 = vld [vmem:[%s3] sm:$0xff]
        %v253 = vld [vmem:[%s3 + $0x8] sm:$0xff]
        %v254 = vld [vmem:[%s3 + $0x10] sm:$0xff]
        %v255 = vld [vmem:[%s3 + $0x18] sm:$0xff]
        %v256 = vld [vmem:[%s3 + $0x20] sm:$0xff]
        %v257 = vld [vmem:[%s3 + $0x28] sm:$0xff]
        %v258 = vld [vmem:[%s3 + $0x30] sm:$0xff]
        %v259 = vld [vmem:[%s3 + $0x38] sm:$0xff]
        %v260 = vld [vmem:[%s3 + $0x40] sm:$0xff]
        %v261 = vld [vmem:[%s3 + $0x48] sm:$0xff]
        %v262 = vld [vmem:[%s3 + $0x50] sm:$0xff]
        %v263 = vld [vmem:[%s3 + $0x58] sm:$0xff]
        %v264 = vld [vmem:[%s3 + $0x60] sm:$0xff]
        %v265 = vld [vmem:[%s3 + $0x68] sm:$0xff]
        %v266 = vld [vmem:[%s3 + $0x70] sm:$0xff]
        %v267 = vld [vmem:[%s3 + $0x78] sm:$0xff]
        %v268 = vld [vmem:[%s1] sm:$0xff]
        %v269 = vld [vmem:[%s1 + $0x8] sm:$0xff]
        %v270 = vld [vmem:[%s1 + $0x10] sm:$0xff]
        %v271 = vld [vmem:[%s1 + $0x18] sm:$0xff]
        %v272 = vld [vmem:[%s1 + $0x20] sm:$0xff]
        %v273 = vld [vmem:[%s1 + $0x28] sm:$0xff]
        %v274 = vld [vmem:[%s1 + $0x30] sm:$0xff]
        %v275 = vld [vmem:[%s1 + $0x38] sm:$0xff]
        %v276 = vld [vmem:[%s1 + $0x40] sm:$0xff]
        %v277 = vld [vmem:[%s1 + $0x48] sm:$0xff]
        %v278 = vld [vmem:[%s1 + $0x50] sm:$0xff]
        %v279 = vld [vmem:[%s1 + $0x58] sm:$0xff]
        %v280 = vld [vmem:[%s1 + $0x60] sm:$0xff]
        %v281 = vld [vmem:[%s1 + $0x68] sm:$0xff]
        %v282 = vld [vmem:[%s1 + $0x70] sm:$0xff]
        %v283 = vld [vmem:[%s1 + $0x78] sm:$0xff]
        %v284 = vld [vmem:[%s2] sm:$0x1]
        %v286 = vlaneseq
        %v287 = vshrl.u32 %v286, 7
        %v288 = vsub.s32 0, %v287
        %v289 = vrot.slane %v284, %v288
        %291 = vmatprep.subr.mxu0 0.0
        %292 = vmatpush1.msra.mxu0 %v268
        %293 = vmatprep.subr.mxu0 0.0
        %294 = vmatpush1.msra.mxu0 %v269
        %295 = vmatprep.subr.mxu0 0.0
        %296 = vmatpush1.msra.mxu0 %v270
        %297 = vmatprep.subr.mxu0 0.0
        %298 = vmatpush1.msra.mxu0 %v271
        %299 = vmatprep.subr.mxu0 0.0
        %300 = vmatpush1.msra.mxu0 %v272
        %301 = vmatprep.subr.mxu0 0.0
        %302 = vmatpush1.msra.mxu0 %v273
        %303 = vmatprep.subr.mxu0 0.0
        %304 = vmatpush1.msra.mxu0 %v274
        %305 = vmatprep.subr.mxu0 0.0
        %306 = vmatpush1.msra.mxu0 %v275
        %307 = vmatprep.subr.mxu0 0.0
        %308 = vmatpush1.msra.mxu0 %v276
        %309 = vmatprep.subr.mxu0 0.0
        %310 = vmatpush1.msra.mxu0 %v277
        %311 = vmatprep.subr.mxu0 0.0
        %312 = vmatpush1.msra.mxu0 %v278
        %313 = vmatprep.subr.mxu0 0.0
        %314 = vmatpush1.msra.mxu0 %v279
        %315 = vmatprep.subr.mxu0 0.0
        %316 = vmatpush1.msra.mxu0 %v280
        %317 = vmatprep.subr.mxu0 0.0
        %318 = vmatpush1.msra.mxu0 %v281
        %319 = vmatprep.subr.mxu0 0.0
        %320 = vmatpush1.msra.mxu0 %v282
        %321 = vmatprep.subr.mxu0 0.0
        %322 = vmatpush1.msra.mxu0 %v283
        %323 = vmatprep.subr.mxu0 0.0
        %324 = vmatpush1.msra.mxu0 0.0
        %325 = vmatprep.subr.mxu0 0.0
        %326 = vmatpush1.msra.mxu0 0.0
        %327 = vmatprep.subr.mxu0 0.0
        %328 = vmatpush1.msra.mxu0 0.0
        %329 = vmatprep.subr.mxu0 0.0
        %330 = vmatpush1.msra.mxu0 0.0
        %331 = vmatprep.subr.mxu0 0.0
        %332 = vmatpush1.msra.mxu0 0.0
        %333 = vmatprep.subr.mxu0 0.0
        %334 = vmatpush1.msra.mxu0 0.0
        %335 = vmatprep.subr.mxu0 0.0
        %336 = vmatpush1.msra.mxu0 0.0
        %337 = vmatprep.subr.mxu0 0.0
        %338 = vmatpush1.msra.mxu0 0.0
        %339 = vmatprep.subr.mxu0 0.0
        %340 = vmatpush1.msra.mxu0 0.0
        %341 = vmatprep.subr.mxu0 0.0
        %342 = vmatpush1.msra.mxu0 0.0
        %343 = vmatprep.subr.mxu0 0.0
        %344 = vmatpush1.msra.mxu0 0.0
        %345 = vmatprep.subr.mxu0 0.0
        %346 = vmatpush1.msra.mxu0 0.0
        %347 = vmatprep.subr.mxu0 0.0
        %348 = vmatpush1.msra.mxu0 0.0
        %349 = vmatprep.subr.mxu0 0.0
        %350 = vmatpush1.msra.mxu0 0.0
        %351 = vmatprep.subr.mxu0 0.0
        %352 = vmatpush1.msra.mxu0 0.0
        %353 = vmatprep.subr.mxu0 0.0
        %354 = vmatpush1.msra.mxu0 0.0
        %355 = vmatprep.mubr.f32.mxu0 0.0
        %356 = vmatmul.mubr.f32.gmra.mrb[0].mxu0 %v248
        %v357 = vpop.f32.mrb[0].mxu0
        %v358 = vadd.f32 %v289, %v357
        %v359 = vpop.f32.mrb[0].mxu0
        %360 = vmatprep.mubr.f32.mxu0 0.0
        %361 = vmatmul.mubr.f32.gmra.mrb[0].mxu0 %v249
        %v362 = vpop.f32.mrb[0].mxu0
        %v363 = vadd.f32 %v289, %v362
        %v364 = vpop.f32.mrb[0].mxu0
        %365 = vmatprep.mubr.f32.mxu0 0.0
        %366 = vmatmul.mubr.f32.gmra.mrb[0].mxu0 %v250
        %v367 = vpop.f32.mrb[0].mxu0
        %v368 = vadd.f32 %v289, %v367
        %v369 = vpop.f32.mrb[0].mxu0
        %370 = vmatprep.mubr.f32.mxu0 0.0
        %371 = vmatmul.mubr.f32.gmra.mrb[0].mxu0 %v251
        %v372 = vpop.f32.mrb[0].mxu0
        %v373 = vadd.f32 %v289, %v372
        %v374 = vpop.f32.mrb[0].mxu0
        %375 = vdwg.mxu0
        %v376 = vmax.f32 %v358, 0.0
        %v377 = vmax.f32 %v363, 0.0
        %v378 = vmax.f32 %v368, 0.0
        %v379 = vmax.f32 %v373, 0.0
        %v380 = vld [vmem:[#allocation2] sm:$0x1]
        %v382 = vlaneseq
        %v383 = vshrl.u32 %v382, 7
        %v384 = vsub.s32 0, %v383
        %v385 = vrot.slane %v380, %v384
        %386 = vset.pattern.permute.xlu0 0
        %387 = vperm.xlu0 %386, %v385
        %v388 = vpop.permute.xlu0 %387
        %390 = vmatprep.subr.mxu0 0.0
        %391 = vmatpush1.msra.mxu0 %v252
        %392 = vmatprep.subr.mxu0 0.0
        %393 = vmatpush1.msra.mxu0 %v253
        %394 = vmatprep.subr.mxu0 0.0
        %395 = vmatpush1.msra.mxu0 %v254
        %396 = vmatprep.subr.mxu0 0.0
        %397 = vmatpush1.msra.mxu0 %v255
        %398 = vmatprep.subr.mxu0 0.0
        %399 = vmatpush1.msra.mxu0 %v256
        %400 = vmatprep.subr.mxu0 0.0
        %401 = vmatpush1.msra.mxu0 %v257
        %402 = vmatprep.subr.mxu0 0.0
        %403 = vmatpush1.msra.mxu0 %v258
        %404 = vmatprep.subr.mxu0 0.0
        %405 = vmatpush1.msra.mxu0 %v259
        %406 = vmatprep.subr.mxu0 0.0
        %407 = vmatpush1.msra.mxu0 %v260
        %408 = vmatprep.subr.mxu0 0.0
        %409 = vmatpush1.msra.mxu0 %v261
        %410 = vmatprep.subr.mxu0 0.0
        %411 = vmatpush1.msra.mxu0 %v262
        %412 = vmatprep.subr.mxu0 0.0
        %413 = vmatpush1.msra.mxu0 %v263
        %414 = vmatprep.subr.mxu0 0.0
        %415 = vmatpush1.msra.mxu0 %v264
        %416 = vmatprep.subr.mxu0 0.0
        %417 = vmatpush1.msra.mxu0 %v265
        %418 = vmatprep.subr.mxu0 0.0
        %419 = vmatpush1.msra.mxu0 %v266
        %420 = vmatprep.subr.mxu0 0.0
        %421 = vmatpush1.msra.mxu0 %v267
        %422 = vmatprep.subr.mxu0 0.0
        %423 = vmatpush1.msra.mxu0 0.0
        %424 = vmatprep.subr.mxu0 0.0
        %425 = vmatpush1.msra.mxu0 0.0
        %426 = vmatprep.subr.mxu0 0.0
        %427 = vmatpush1.msra.mxu0 0.0
        %428 = vmatprep.subr.mxu0 0.0
        %429 = vmatpush1.msra.mxu0 0.0
        %430 = vmatprep.subr.mxu0 0.0
        %431 = vmatpush1.msra.mxu0 0.0
        %432 = vmatprep.subr.mxu0 0.0
        %433 = vmatpush1.msra.mxu0 0.0
        %434 = vmatprep.subr.mxu0 0.0
        %435 = vmatpush1.msra.mxu0 0.0
        %436 = vmatprep.subr.mxu0 0.0
        %437 = vmatpush1.msra.mxu0 0.0
        %438 = vmatprep.subr.mxu0 0.0
        %439 = vmatpush1.msra.mxu0 0.0
        %440 = vmatprep.subr.mxu0 0.0
        %441 = vmatpush1.msra.mxu0 0.0
        %442 = vmatprep.subr.mxu0 0.0
        %443 = vmatpush1.msra.mxu0 0.0
        %444 = vmatprep.subr.mxu0 0.0
        %445 = vmatpush1.msra.mxu0 0.0
        %446 = vmatprep.subr.mxu0 0.0
        %447 = vmatpush1.msra.mxu0 0.0
        %448 = vmatprep.subr.mxu0 0.0
        %449 = vmatpush1.msra.mxu0 0.0
        %450 = vmatprep.subr.mxu0 0.0
        %451 = vmatpush1.msra.mxu0 0.0
        %452 = vmatprep.subr.mxu0 0.0
        %453 = vmatpush1.msra.mxu0 0.0
        %454 = vmatprep.mubr.f32.mxu0 0.0
        %455 = vmatmul.mubr.f32.gmra.mrb[0].mxu0 %v376
        %v456 = vpop.f32.mrb[0].mxu0
        %v457 = vadd.f32 %v388, %v456
        %v458 = vpop.f32.mrb[0].mxu0
        %459 = vmatprep.mubr.f32.mxu0 0.0
        %460 = vmatmul.mubr.f32.gmra.mrb[0].mxu0 %v377
        %v461 = vpop.f32.mrb[0].mxu0
        %v462 = vadd.f32 %v388, %v461
        %v463 = vpop.f32.mrb[0].mxu0
        %464 = vmatprep.mubr.f32.mxu0 0.0
        %465 = vmatmul.mubr.f32.gmra.mrb[0].mxu0 %v378
        %v466 = vpop.f32.mrb[0].mxu0
        %v467 = vadd.f32 %v388, %v466
        %v468 = vpop.f32.mrb[0].mxu0
        %469 = vmatprep.mubr.f32.mxu0 0.0
        %470 = vmatmul.mubr.f32.gmra.mrb[0].mxu0 %v379
        %v471 = vpop.f32.mrb[0].mxu0
        %v472 = vadd.f32 %v388, %v471
        %v473 = vpop.f32.mrb[0].mxu0
        %474 = vdwg.mxu0
        %v475 = vxor.u32 %v457, 2147483648
        %v476 = vxor.u32 %v462, 2147483648
        %v477 = vxor.u32 %v467, 2147483648
        %v478 = vxor.u32 %v472, 2147483648
        %v479 = vmul.f32 %v475, 1.442695
        %v480 = vpow.pop %v479
        %v481 = vmul.f32 %v476, 1.442695
        %v482 = vpow.pop %v481
        %v483 = vmul.f32 %v477, 1.442695
        %v484 = vpow.pop %v483
        %v485 = vmul.f32 %v478, 1.442695
        %v486 = vpow.pop %v485
        %v487 = vadd.f32 %v480, 1.0
        %v488 = vadd.f32 %v482, 1.0
        %v489 = vadd.f32 %v484, 1.0
        %v490 = vadd.f32 %v486, 1.0
        %v491 = vrcp.pop %v487
        %v492 = vmul.f32 1.0, %v491
        %v493 = vrcp.pop %v488
        %v494 = vmul.f32 1.0, %v493
        %v495 = vrcp.pop %v489
        %v496 = vmul.f32 1.0, %v495
        %v497 = vrcp.pop %v490
        %v498 = vmul.f32 1.0, %v497
        %vm499 = vcmask 31744
        %500 = vst.msk [vmem:[%s228] sm:$0xff] %vm499, %v492
        %501 = vst.msk [vmem:[%s228 + $0x8] sm:$0xff] %vm499, %v494
        %502 = vst.msk [vmem:[%s228 + $0x10] sm:$0xff] %vm499, %v496
        %503 = vst.msk [vmem:[%s228 + $0x18] sm:$0xff] %vm499, %v498
        %s504 = sand.u32 %s136, 1
        %s505 = sand.u32 %s136, 1
        %s506 = smul.addr %s505, 32
        %s507 = scalar_lea.vmem [#allocation3], %s506
        // Predicated region
        $region41: #{fcn_binary_classifier.1} parent=39 // pred_check
          %p508 = pneg %p146
        $region42: #{fcn_binary_classifier.1} parent=39 // pred_check_branch
          %510 = sbr.rel (%p508) target = $region44
        $region43: #{fcn_binary_classifier.1} parent=39 // pred_region
          %s511 = smul.u32 4, %s18
          %s512 = ssub.s32 7, %s511
          %p513 = scmp.lt.s32.totalorder %s512, 4
          %s514 = scalar_select %p513, %s512, 4
          %s515 = smul.u32 128, %s514
          %p516 = scmp.ne.s32.totalorder 0, %s515
          %s517 = smul.addr %s511, 8
          %s518 = scalar_lea.vmem %s5, %s517
          // Predicated region
          $region45: #{fcn_binary_classifier.1} parent=43 // pred_check
            %p519 = pneg %p516
          $region46: #{fcn_binary_classifier.1} parent=43 // pred_check_branch
            %521 = sbr.rel (%p519) target = $region48
          $region47: #{fcn_binary_classifier.1} parent=43 // pred_region
            // Predicated region
            $region49: #{fcn_binary_classifier.1} parent=47 // pred_check
              _
            $region50: #{fcn_binary_classifier.1} parent=47 // pred_check_branch
              %523 = sbr.rel (0) target = $region52
            $region51: #{fcn_binary_classifier.1} parent=47 // pred_region
              // Predicated region
              $region71: #{fcn_binary_classifier.1} parent=51 // pred_check
                _
              $region72: #{fcn_binary_classifier.1} parent=51 // pred_check_branch
                %578 = sbr.rel (0) target = $region74
              $region73: #{fcn_binary_classifier.1} parent=51 // pred_region
                %s579 = sshrl.u32 %s514, 2
                // While loop
                $region75: #{fcn_binary_classifier.1} parent=73 // loop_pre_header
                  _
                $region76: #{fcn_binary_classifier.1} parent=73 // loop_header
                  %s581 = sphi 0, %s583
                  %p582 = scmp.ge.s32.totalorder %s581, %s579
                  %s586 = sphi 0, %s599
                  %s587 = sphi %s507, %s602
                  %s588 = sphi %s518, %s603
                $region77: #{fcn_binary_classifier.1} parent=73 // loop_header_branch
                  %585 = sbr.rel (%p582) target = $region81
                $region78: #{fcn_binary_classifier.1} parent=73 // loop_body
                  %v589 = vld [vmem:[%s587] sm:$0xff]
                  %590 = vst [vmem:[%s588] sm:$0xff] %v589
                  %v591 = vld [vmem:[%s587 + $0x8] sm:$0xff]
                  %592 = vst [vmem:[%s588 + $0x8] sm:$0xff] %v591
                  %v593 = vld [vmem:[%s587 + $0x10] sm:$0xff]
                  %594 = vst [vmem:[%s588 + $0x10] sm:$0xff] %v593
                  %v595 = vld [vmem:[%s587 + $0x18] sm:$0xff]
                  %596 = vst [vmem:[%s588 + $0x18] sm:$0xff] %v595
                  %s597 = sadd.s32 1, %s586
                  %p598 = scmp.ge.s32.totalorder %s597, %s579
                  %s599 = scalar_select %p598, 0, %s597
                  %s600 = smul.u32 %s599, 32
                  %s601 = smul.u32 %s599, 32
                  %s602 = scalar_lea.vmem %s507, %s600 [#allocation3]
                  %s603 = scalar_lea.vmem %s518, %s601
                $region79: #{fcn_binary_classifier.1} parent=73 // loop_footer
                  %s583 = sadd.s32 %s581, 1
                $region80: #{fcn_binary_classifier.1} parent=73 // loop_footer_branch
                  %580 = sbr.rel target = $region76
                $region81: #{fcn_binary_classifier.1} parent=73 // loop_exit
                  _
                %s604 = sshrl.u32 %s514, 2
                %s605 = sand.u32 %s514, 3
                %s606 = smul.u32 %s604, 4
                %s607 = smul.u32 8, %s606
                %s608 = scalar_lea.vmem %s507, %s607 [#allocation3]
                %s609 = smul.u32 8, %s606
                %s610 = scalar_lea.vmem %s518, %s609
                // While loop
                $region82: #{fcn_binary_classifier.1} parent=73 // loop_pre_header
                  _
                $region83: #{fcn_binary_classifier.1} parent=73 // loop_header
                  %s612 = sphi 0, %s614
                  %p613 = scmp.ge.s32.totalorder %s612, %s605
                  %s617 = sphi 0, %s624
                  %s618 = sphi %s608, %s627
                  %s619 = sphi %s610, %s628
                $region84: #{fcn_binary_classifier.1} parent=73 // loop_header_branch
                  %616 = sbr.rel (%p613) target = $region88
                $region85: #{fcn_binary_classifier.1} parent=73 // loop_body
                  %v620 = vld [vmem:[%s618] sm:$0xff]
                  %621 = vst [vmem:[%s619] sm:$0xff] %v620
                  %s622 = sadd.s32 1, %s617
                  %p623 = scmp.ge.s32.totalorder %s622, %s605
                  %s624 = scalar_select %p623, 0, %s622
                  %s625 = smul.u32 %s624, 8
                  %s626 = smul.u32 %s624, 8
                  %s627 = scalar_lea.vmem %s608, %s625 [#allocation3]
                  %s628 = scalar_lea.vmem %s610, %s626
                $region86: #{fcn_binary_classifier.1} parent=73 // loop_footer
                  %s614 = sadd.s32 %s612, 1
                $region87: #{fcn_binary_classifier.1} parent=73 // loop_footer_branch
                  %611 = sbr.rel target = $region83
                $region88: #{fcn_binary_classifier.1} parent=73 // loop_exit
                  _
              $region74: #{fcn_binary_classifier.1} parent=51 // pred_fallthru
                _
              // Predicated region
              $region89: #{fcn_binary_classifier.1} parent=51 // pred_check
                _
              $region90: #{fcn_binary_classifier.1} parent=51 // pred_check_branch
                %630 = sbr.rel target = $region92
              $region91: #{fcn_binary_classifier.1} parent=51 // pred_region
                _
              $region92: #{fcn_binary_classifier.1} parent=51 // pred_fallthru
                _
            $region52: #{fcn_binary_classifier.1} parent=47 // pred_fallthru
              _
            // Predicated region
            $region53: #{fcn_binary_classifier.1} parent=47 // pred_check
              _
            $region54: #{fcn_binary_classifier.1} parent=47 // pred_check_branch
              %525 = sbr.rel target = $region56
            $region55: #{fcn_binary_classifier.1} parent=47 // pred_region
              %s527 = sshrl.u32 %s514, 2
              // While loop
              $region57: #{fcn_binary_classifier.1} parent=55 // loop_pre_header
                _
              $region58: #{fcn_binary_classifier.1} parent=55 // loop_header
                %s529 = sphi 0, %s531
                %p530 = scmp.ge.s32.totalorder %s529, %s527
                %s534 = sphi 0, %s547
                %s535 = sphi %s507, %s550
                %s536 = sphi %s518, %s551
              $region59: #{fcn_binary_classifier.1} parent=55 // loop_header_branch
                %533 = sbr.rel (%p530) target = $region63
              $region60: #{fcn_binary_classifier.1} parent=55 // loop_body
                %v537 = vld [vmem:[%s535] sm:$0xff]
                %538 = vst [vmem:[%s536] sm:$0xff] %v537
                %v539 = vld [vmem:[%s535 + $0x8] sm:$0xff]
                %540 = vst [vmem:[%s536 + $0x8] sm:$0xff] %v539
                %v541 = vld [vmem:[%s535 + $0x10] sm:$0xff]
                %542 = vst [vmem:[%s536 + $0x10] sm:$0xff] %v541
                %v543 = vld [vmem:[%s535 + $0x18] sm:$0xff]
                %544 = vst [vmem:[%s536 + $0x18] sm:$0xff] %v543
                %s545 = sadd.s32 1, %s534
                %p546 = scmp.ge.s32.totalorder %s545, %s527
                %s547 = scalar_select %p546, 0, %s545
                %s548 = smul.u32 %s547, 32
                %s549 = smul.u32 %s547, 32
                %s550 = scalar_lea.vmem %s507, %s548 [#allocation3]
                %s551 = scalar_lea.vmem %s518, %s549
              $region61: #{fcn_binary_classifier.1} parent=55 // loop_footer
                %s531 = sadd.s32 %s529, 1
              $region62: #{fcn_binary_classifier.1} parent=55 // loop_footer_branch
                %528 = sbr.rel target = $region58
              $region63: #{fcn_binary_classifier.1} parent=55 // loop_exit
                _
              %s552 = sshrl.u32 %s514, 2
              %s553 = sand.u32 %s514, 3
              %s554 = smul.u32 %s552, 4
              %s555 = smul.u32 8, %s554
              %s556 = scalar_lea.vmem %s507, %s555 [#allocation3]
              %s557 = smul.u32 8, %s554
              %s558 = scalar_lea.vmem %s518, %s557
              // While loop
              $region64: #{fcn_binary_classifier.1} parent=55 // loop_pre_header
                _
              $region65: #{fcn_binary_classifier.1} parent=55 // loop_header
                %s560 = sphi 0, %s562
                %p561 = scmp.ge.s32.totalorder %s560, %s553
                %s565 = sphi 0, %s572
                %s566 = sphi %s556, %s575
                %s567 = sphi %s558, %s576
              $region66: #{fcn_binary_classifier.1} parent=55 // loop_header_branch
                %564 = sbr.rel (%p561) target = $region70
              $region67: #{fcn_binary_classifier.1} parent=55 // loop_body
                %v568 = vld [vmem:[%s566] sm:$0xff]
                %569 = vst [vmem:[%s567] sm:$0xff] %v568
                %s570 = sadd.s32 1, %s565
                %p571 = scmp.ge.s32.totalorder %s570, %s553
                %s572 = scalar_select %p571, 0, %s570
                %s573 = smul.u32 %s572, 8
                %s574 = smul.u32 %s572, 8
                %s575 = scalar_lea.vmem %s556, %s573 [#allocation3]
                %s576 = scalar_lea.vmem %s558, %s574
              $region68: #{fcn_binary_classifier.1} parent=55 // loop_footer
                %s562 = sadd.s32 %s560, 1
              $region69: #{fcn_binary_classifier.1} parent=55 // loop_footer_branch
                %559 = sbr.rel target = $region65
              $region70: #{fcn_binary_classifier.1} parent=55 // loop_exit
                _
            $region56: #{fcn_binary_classifier.1} parent=47 // pred_fallthru
              _
          $region48: #{fcn_binary_classifier.1} parent=43 // pred_fallthru
            _
          %631 = vnop
        $region44: #{fcn_binary_classifier.1} parent=39 // pred_fallthru
          _
      $region40: #{fcn_binary_classifier.1} parent=5 // pred_fallthru
        _
      %p632 = scmp.le.s32.totalorder 2, %s13
      // Predicated region
      $region93: #{fcn_binary_classifier.1} parent=5 // pred_check
        %p633 = pneg %p632
      $region94: #{fcn_binary_classifier.1} parent=5 // pred_check_branch
        %635 = sbr.rel (%p633) target = $region96
      $region95: #{fcn_binary_classifier.1} parent=5 // pred_region
        %s636 = ssub.s32 %s13, 2
        // Predicated region
        $region97: #{fcn_binary_classifier.1} parent=95 // pred_check
          %p637 = pneg %p152
        $region98: #{fcn_binary_classifier.1} parent=95 // pred_check_branch
          %639 = sbr.rel (%p637) target = $region100
        $region99: #{fcn_binary_classifier.1} parent=95 // pred_region
          %s640 = sand.u32 %s137, 1
          %s641 = sand.u32 %s137, 1
          %s642 = smul.addr %s641, 32
          %s643 = scalar_lea.vmem [#allocation3], %s642
        $region100: #{fcn_binary_classifier.1} parent=95 // pred_fallthru
          _
      $region96: #{fcn_binary_classifier.1} parent=5 // pred_fallthru
        _
    $region6: #{fcn_binary_classifier.1} parent=1 // loop_footer
      %s17 = sadd.s32 1, %s13
    $region7: #{fcn_binary_classifier.1} parent=1 // loop_footer_branch
      %12 = sbr.rel target = $region3
    $region8: #{fcn_binary_classifier.1} parent=1 // loop_exit
      _

</llo_original>
